<compile_context>
chip_gen: v5e
topology: v5e:2x2
jax: 0.10.0
libtpu: 0.0.40
codegen_flags: <defaults>
</compile_context>

<pallas_src>
import math
import functools

import jax
import jax.numpy as jnp
from jax.experimental import pallas as pl
from jax.experimental.pallas import tpu as pltpu


def _embed_kernel(ids_ref, pos_ref, table_ref, out_ref, row_buf, sems, *,
                  tm, d_model, vocab):
    """One grid step handles `tm` consecutive (flattened batch-major) tokens.

    ids_ref   : (B*S,)  int32   SMEM  (scalar prefetch)
    pos_ref   : (tm, D) f32     VMEM  (auto-pipelined input)
    table_ref : (V, D)  f32     HBM   (memory_space=pl.ANY, manual DMA)
    out_ref   : (tm, D) f32     VMEM  (auto-pipelined output)
    row_buf   : (tm, D) f32     VMEM scratch (gather landing buffer)
    sems      : (tm,)   DMA semaphores
    """
    base = pl.program_id(0) * tm

    # Issue one row-gather DMA per token in the tile; all TM copies are in
    # flight concurrently.  tm is a small compile-time constant.
    for t in range(tm):
        tok = ids_ref[base + t]
        # Clamp to valid range (matches jnp.take's clip semantics; PyTorch
        # nn.Embedding would raise on OOB ids).
        tok = jnp.minimum(jnp.maximum(tok, 0), vocab - 1)
        pltpu.make_async_copy(table_ref.at[pl.ds(tok, 1), :],
                              row_buf.at[pl.ds(t, 1), :],
                              sems.at[t]).start()

    # Wait for all gathered rows to land.
    for t in range(tm):
        pltpu.make_async_copy(table_ref.at[pl.ds(0, 1), :],
                              row_buf.at[pl.ds(t, 1), :],
                              sems.at[t]).wait()

    # Scale + positional add in f32 on the VPU, one lane-dense store.
    out_ref[...] = row_buf[...] * jnp.float32(math.sqrt(d_model)) + pos_ref[...]
    # TODO(synk): training-mode dropout (p=0.1) not implemented; eval-mode
    # dropout is the identity, which is what is computed here.


def _pick_token_tile(seq_len):
    """Largest token tile (multiple of 8, <=512) that divides the sequence."""
    for cand in (512, 256, 128, 64, 32, 16, 8):
        if seq_len % cand == 0:
            return cand
    return seq_len  # fallback: whole sequence per tile


def transformer_embedding(ids, table, pos_encoding):
    """ids: (B, S) int32, table: (V, D) f32, pos_encoding: (max_size, D) f32."""
    B, S = ids.shape
    V, D = table.shape

    tm = _pick_token_tile(S)
    tiles_per_seq = S // tm
    num_tiles = (B * S) // tm

    pos = pos_encoding[:S, :]                       # same slice as PyTorch
    ids_flat = ids.reshape(B * S).astype(jnp.int32)

    kernel = functools.partial(_embed_kernel, tm=tm, d_model=D, vocab=V)

    # Token tile i covers flat tokens [i*tm, (i+1)*tm); its seq-block index is
    # i % tiles_per_seq (batch-major flattening, tm divides S).
    if tiles_per_seq == 1:
        pos_index = lambda i, ids_ref: (0, 0)
    else:
        pos_index = lambda i, ids_ref: (i % tiles_per_seq, 0)

    cost = pl.CostEstimate(
        flops=2 * B * S * D,                                   # scale + add
        transcendentals=0,
        bytes_accessed=2 * B * S * D * 4 + S * D * 4 + B * S * 4,
    )

    out = pl.pallas_call(
        kernel,
        out_shape=jax.ShapeDtypeStruct((B * S, D), jnp.float32),
        grid_spec=pltpu.PrefetchScalarGridSpec(
            num_scalar_prefetch=1,                             # ids -> SMEM
            grid=(num_tiles,),
            in_specs=[
                pl.BlockSpec((tm, D), pos_index),              # pos encoding
                pl.BlockSpec(memory_space=pl.ANY),             # table in HBM
            ],
            out_specs=pl.BlockSpec((tm, D), lambda i, ids_ref: (i, 0)),
            scratch_shapes=[
                pltpu.VMEM((tm, D), table.dtype),              # gather buffer
                pltpu.SemaphoreType.DMA((tm,)),
            ],
        ),
        compiler_params=pltpu.CompilerParams(
            dimension_semantics=("parallel",),   # shards grid over v7x's 2 TCs
        ),
        cost_estimate=cost,
    )(ids_flat, pos, table)
    return out.reshape(B, S, D)


def make_positional_encoding(max_size, d_model):
    """Same construction as PyTorch PositionalEncoding.__init__ (even D)."""
    assert d_model % 2 == 0, "sinusoidal encoding assumes even d_model"
    pos = jnp.arange(max_size, dtype=jnp.float32)[:, None]            # (L, 1)
    _2i = jnp.arange(0, d_model, 2, dtype=jnp.float32)                # (D/2,)
    div_term = jnp.exp(_2i * -(math.log(10000.0) / d_model))          # (D/2,)
    enc = jnp.zeros((max_size, d_model), jnp.float32)
    enc = enc.at[:, 0::2].set(jnp.sin(pos * div_term))
    enc = enc.at[:, 1::2].set(jnp.cos(pos * div_term))
    return enc


if __name__ == "__main__":
    # Small, deterministic shapes (d_model = 128 keeps output stores lane-dense).
    VOCAB = 64
    D_MODEL = 128
    MAX_SIZE = 16
    BATCH = 2
    SEQ = 8

    key = jax.random.PRNGKey(0)
    k_tab, k_ids = jax.random.split(key)

    table = jax.random.normal(k_tab, (VOCAB, D_MODEL), dtype=jnp.float32)
    ids = jax.random.randint(k_ids, (BATCH, SEQ), 0, VOCAB, dtype=jnp.int32)
    pos_encoding = make_positional_encoding(MAX_SIZE, D_MODEL)

    out = transformer_embedding(ids, table, pos_encoding)
    out = jax.block_until_ready(out)

    # Pure-JAX reference (eval-mode dropout == identity).
    ref = jnp.take(table, ids, axis=0) * math.sqrt(D_MODEL) \
        + pos_encoding[:SEQ, :][None, :, :]
    assert out.shape == (BATCH, SEQ, D_MODEL)
    assert jnp.allclose(out, ref, atol=1e-5, rtol=1e-5)

    print("KERNEL_OK")
</pallas_src>

<mosaic_0001>
module attributes {stable_mosaic.version = 11 : i64} {
  func.func @_embed_kernel(%arg0: i32, %arg1: memref<16xi32, #tpu.memory_space<smem>>, %arg2: memref<8x128xf32, #tpu.memory_space<vmem>>, %arg3: memref<64x128xf32, #tpu.memory_space<any>>, %arg4: memref<8x128xf32, #tpu.memory_space<vmem>>, %arg5: memref<8x128xf32, #tpu.memory_space<vmem>>, %arg6: memref<8x!tpu.dma_semaphore, #tpu.memory_space<semaphore_mem>>) attributes {dimension_semantics = [#tpu.dimension_semantics<parallel>], iteration_bounds = array<i64: 2>, scalar_prefetch = 1 : i64, scratch_operands = 2 : i64, tpu.core_type = #tpu.core_type<tc>, window_params = [{pipeline_mode = #tpu.pipeline_mode<synchronous>, transform_indices = @transform_0, window_bounds = array<i64: 8, 128>}, {}, {transform_indices = @transform_2, window_bounds = array<i64: 8, 128>}]} {
    %c8_i32 = arith.constant 8 : i32
    %0 = arith.muli %arg0, %c8_i32 : i32
    %c0_i32 = arith.constant 0 : i32
    %1 = arith.addi %0, %c0_i32 : i32
    %2 = arith.index_cast %1 : i32 to index
    %3 = memref.load %arg1[%2] : memref<16xi32, #tpu.memory_space<smem>>
    %c0_i32_0 = arith.constant 0 : i32
    %4 = arith.maxsi %3, %c0_i32_0 : i32
    %c63_i32 = arith.constant 63 : i32
    %5 = arith.minsi %4, %c63_i32 : i32
    %c0_i32_1 = arith.constant 0 : i32
    %c0_i32_2 = arith.constant 0 : i32
    %6 = tpu.memref_slice %arg3[%5, %c0_i32_2] : memref<64x128xf32, #tpu.memory_space<any>> -> memref<1x128xf32, #tpu.memory_space<any>>
    %c0_i32_3 = arith.constant 0 : i32
    %c0_i32_4 = arith.constant 0 : i32
    %7 = tpu.memref_slice %arg5[%c0_i32_3, %c0_i32_4] : memref<8x128xf32, #tpu.memory_space<vmem>> -> memref<1x128xf32, #tpu.memory_space<vmem>>
    %8 = tpu.memref_slice %arg6[%c0_i32_1] : memref<8x!tpu.dma_semaphore, #tpu.memory_space<semaphore_mem>> -> memref<1x!tpu.dma_semaphore, #tpu.memory_space<semaphore_mem>>
    %9 = tpu.memref_squeeze %8 : memref<1x!tpu.dma_semaphore, #tpu.memory_space<semaphore_mem>> -> memref<!tpu.dma_semaphore, #tpu.memory_space<semaphore_mem>>
    tpu.enqueue_dma source(%6 : memref<1x128xf32, #tpu.memory_space<any>>) target(%7 : memref<1x128xf32, #tpu.memory_space<vmem>>) target_semaphore(%9 : memref<!tpu.dma_semaphore, #tpu.memory_space<semaphore_mem>>)
    %c1_i32 = arith.constant 1 : i32
    %10 = arith.addi %0, %c1_i32 : i32
    %11 = arith.index_cast %10 : i32 to index
    %12 = memref.load %arg1[%11] : memref<16xi32, #tpu.memory_space<smem>>
    %c0_i32_5 = arith.constant 0 : i32
    %13 = arith.maxsi %12, %c0_i32_5 : i32
    %c63_i32_6 = arith.constant 63 : i32
    %14 = arith.minsi %13, %c63_i32_6 : i32
    %c1_i32_7 = arith.constant 1 : i32
    %c0_i32_8 = arith.constant 0 : i32
    %15 = tpu.memref_slice %arg3[%14, %c0_i32_8] : memref<64x128xf32, #tpu.memory_space<any>> -> memref<1x128xf32, #tpu.memory_space<any>>
    %c1_i32_9 = arith.constant 1 : i32
    %c0_i32_10 = arith.constant 0 : i32
    %16 = tpu.memref_slice %arg5[%c1_i32_9, %c0_i32_10] : memref<8x128xf32, #tpu.memory_space<vmem>> -> memref<1x128xf32, #tpu.memory_space<vmem>>
    %17 = tpu.memref_slice %arg6[%c1_i32_7] : memref<8x!tpu.dma_semaphore, #tpu.memory_space<semaphore_mem>> -> memref<1x!tpu.dma_semaphore, #tpu.memory_space<semaphore_mem>>
    %18 = tpu.memref_squeeze %17 : memref<1x!tpu.dma_semaphore, #tpu.memory_space<semaphore_mem>> -> memref<!tpu.dma_semaphore, #tpu.memory_space<semaphore_mem>>
    tpu.enqueue_dma source(%15 : memref<1x128xf32, #tpu.memory_space<any>>) target(%16 : memref<1x128xf32, #tpu.memory_space<vmem>>) target_semaphore(%18 : memref<!tpu.dma_semaphore, #tpu.memory_space<semaphore_mem>>)
    %c2_i32 = arith.constant 2 : i32
    %19 = arith.addi %0, %c2_i32 : i32
    %20 = arith.index_cast %19 : i32 to index
    %21 = memref.load %arg1[%20] : memref<16xi32, #tpu.memory_space<smem>>
    %c0_i32_11 = arith.constant 0 : i32
    %22 = arith.maxsi %21, %c0_i32_11 : i32
    %c63_i32_12 = arith.constant 63 : i32
    %23 = arith.minsi %22, %c63_i32_12 : i32
    %c2_i32_13 = arith.constant 2 : i32
    %c0_i32_14 = arith.constant 0 : i32
    %24 = tpu.memref_slice %arg3[%23, %c0_i32_14] : memref<64x128xf32, #tpu.memory_space<any>> -> memref<1x128xf32, #tpu.memory_space<any>>
    %c2_i32_15 = arith.constant 2 : i32
    %c0_i32_16 = arith.constant 0 : i32
    %25 = tpu.memref_slice %arg5[%c2_i32_15, %c0_i32_16] : memref<8x128xf32, #tpu.memory_space<vmem>> -> memref<1x128xf32, #tpu.memory_space<vmem>>
    %26 = tpu.memref_slice %arg6[%c2_i32_13] : memref<8x!tpu.dma_semaphore, #tpu.memory_space<semaphore_mem>> -> memref<1x!tpu.dma_semaphore, #tpu.memory_space<semaphore_mem>>
    %27 = tpu.memref_squeeze %26 : memref<1x!tpu.dma_semaphore, #tpu.memory_space<semaphore_mem>> -> memref<!tpu.dma_semaphore, #tpu.memory_space<semaphore_mem>>
    tpu.enqueue_dma source(%24 : memref<1x128xf32, #tpu.memory_space<any>>) target(%25 : memref<1x128xf32, #tpu.memory_space<vmem>>) target_semaphore(%27 : memref<!tpu.dma_semaphore, #tpu.memory_space<semaphore_mem>>)
    %c3_i32 = arith.constant 3 : i32
    %28 = arith.addi %0, %c3_i32 : i32
    %29 = arith.index_cast %28 : i32 to index
    %30 = memref.load %arg1[%29] : memref<16xi32, #tpu.memory_space<smem>>
    %c0_i32_17 = arith.constant 0 : i32
    %31 = arith.maxsi %30, %c0_i32_17 : i32
    %c63_i32_18 = arith.constant 63 : i32
    %32 = arith.minsi %31, %c63_i32_18 : i32
    %c3_i32_19 = arith.constant 3 : i32
    %c0_i32_20 = arith.constant 0 : i32
    %33 = tpu.memref_slice %arg3[%32, %c0_i32_20] : memref<64x128xf32, #tpu.memory_space<any>> -> memref<1x128xf32, #tpu.memory_space<any>>
    %c3_i32_21 = arith.constant 3 : i32
    %c0_i32_22 = arith.constant 0 : i32
    %34 = tpu.memref_slice %arg5[%c3_i32_21, %c0_i32_22] : memref<8x128xf32, #tpu.memory_space<vmem>> -> memref<1x128xf32, #tpu.memory_space<vmem>>
    %35 = tpu.memref_slice %arg6[%c3_i32_19] : memref<8x!tpu.dma_semaphore, #tpu.memory_space<semaphore_mem>> -> memref<1x!tpu.dma_semaphore, #tpu.memory_space<semaphore_mem>>
    %36 = tpu.memref_squeeze %35 : memref<1x!tpu.dma_semaphore, #tpu.memory_space<semaphore_mem>> -> memref<!tpu.dma_semaphore, #tpu.memory_space<semaphore_mem>>
    tpu.enqueue_dma source(%33 : memref<1x128xf32, #tpu.memory_space<any>>) target(%34 : memref<1x128xf32, #tpu.memory_space<vmem>>) target_semaphore(%36 : memref<!tpu.dma_semaphore, #tpu.memory_space<semaphore_mem>>)
    %c4_i32 = arith.constant 4 : i32
    %37 = arith.addi %0, %c4_i32 : i32
    %38 = arith.index_cast %37 : i32 to index
    %39 = memref.load %arg1[%38] : memref<16xi32, #tpu.memory_space<smem>>
    %c0_i32_23 = arith.constant 0 : i32
    %40 = arith.maxsi %39, %c0_i32_23 : i32
    %c63_i32_24 = arith.constant 63 : i32
    %41 = arith.minsi %40, %c63_i32_24 : i32
    %c4_i32_25 = arith.constant 4 : i32
    %c0_i32_26 = arith.constant 0 : i32
    %42 = tpu.memref_slice %arg3[%41, %c0_i32_26] : memref<64x128xf32, #tpu.memory_space<any>> -> memref<1x128xf32, #tpu.memory_space<any>>
    %c4_i32_27 = arith.constant 4 : i32
    %c0_i32_28 = arith.constant 0 : i32
    %43 = tpu.memref_slice %arg5[%c4_i32_27, %c0_i32_28] : memref<8x128xf32, #tpu.memory_space<vmem>> -> memref<1x128xf32, #tpu.memory_space<vmem>>
    %44 = tpu.memref_slice %arg6[%c4_i32_25] : memref<8x!tpu.dma_semaphore, #tpu.memory_space<semaphore_mem>> -> memref<1x!tpu.dma_semaphore, #tpu.memory_space<semaphore_mem>>
    %45 = tpu.memref_squeeze %44 : memref<1x!tpu.dma_semaphore, #tpu.memory_space<semaphore_mem>> -> memref<!tpu.dma_semaphore, #tpu.memory_space<semaphore_mem>>
    tpu.enqueue_dma source(%42 : memref<1x128xf32, #tpu.memory_space<any>>) target(%43 : memref<1x128xf32, #tpu.memory_space<vmem>>) target_semaphore(%45 : memref<!tpu.dma_semaphore, #tpu.memory_space<semaphore_mem>>)
    %c5_i32 = arith.constant 5 : i32
    %46 = arith.addi %0, %c5_i32 : i32
    %47 = arith.index_cast %46 : i32 to index
    %48 = memref.load %arg1[%47] : memref<16xi32, #tpu.memory_space<smem>>
    %c0_i32_29 = arith.constant 0 : i32
    %49 = arith.maxsi %48, %c0_i32_29 : i32
    %c63_i32_30 = arith.constant 63 : i32
    %50 = arith.minsi %49, %c63_i32_30 : i32
    %c5_i32_31 = arith.constant 5 : i32
    %c0_i32_32 = arith.constant 0 : i32
    %51 = tpu.memref_slice %arg3[%50, %c0_i32_32] : memref<64x128xf32, #tpu.memory_space<any>> -> memref<1x128xf32, #tpu.memory_space<any>>
    %c5_i32_33 = arith.constant 5 : i32
    %c0_i32_34 = arith.constant 0 : i32
    %52 = tpu.memref_slice %arg5[%c5_i32_33, %c0_i32_34] : memref<8x128xf32, #tpu.memory_space<vmem>> -> memref<1x128xf32, #tpu.memory_space<vmem>>
    %53 = tpu.memref_slice %arg6[%c5_i32_31] : memref<8x!tpu.dma_semaphore, #tpu.memory_space<semaphore_mem>> -> memref<1x!tpu.dma_semaphore, #tpu.memory_space<semaphore_mem>>
    %54 = tpu.memref_squeeze %53 : memref<1x!tpu.dma_semaphore, #tpu.memory_space<semaphore_mem>> -> memref<!tpu.dma_semaphore, #tpu.memory_space<semaphore_mem>>
    tpu.enqueue_dma source(%51 : memref<1x128xf32, #tpu.memory_space<any>>) target(%52 : memref<1x128xf32, #tpu.memory_space<vmem>>) target_semaphore(%54 : memref<!tpu.dma_semaphore, #tpu.memory_space<semaphore_mem>>)
    %c6_i32 = arith.constant 6 : i32
    %55 = arith.addi %0, %c6_i32 : i32
    %56 = arith.index_cast %55 : i32 to index
    %57 = memref.load %arg1[%56] : memref<16xi32, #tpu.memory_space<smem>>
    %c0_i32_35 = arith.constant 0 : i32
    %58 = arith.maxsi %57, %c0_i32_35 : i32
    %c63_i32_36 = arith.constant 63 : i32
    %59 = arith.minsi %58, %c63_i32_36 : i32
    %c6_i32_37 = arith.constant 6 : i32
    %c0_i32_38 = arith.constant 0 : i32
    %60 = tpu.memref_slice %arg3[%59, %c0_i32_38] : memref<64x128xf32, #tpu.memory_space<any>> -> memref<1x128xf32, #tpu.memory_space<any>>
    %c6_i32_39 = arith.constant 6 : i32
    %c0_i32_40 = arith.constant 0 : i32
    %61 = tpu.memref_slice %arg5[%c6_i32_39, %c0_i32_40] : memref<8x128xf32, #tpu.memory_space<vmem>> -> memref<1x128xf32, #tpu.memory_space<vmem>>
    %62 = tpu.memref_slice %arg6[%c6_i32_37] : memref<8x!tpu.dma_semaphore, #tpu.memory_space<semaphore_mem>> -> memref<1x!tpu.dma_semaphore, #tpu.memory_space<semaphore_mem>>
    %63 = tpu.memref_squeeze %62 : memref<1x!tpu.dma_semaphore, #tpu.memory_space<semaphore_mem>> -> memref<!tpu.dma_semaphore, #tpu.memory_space<semaphore_mem>>
    tpu.enqueue_dma source(%60 : memref<1x128xf32, #tpu.memory_space<any>>) target(%61 : memref<1x128xf32, #tpu.memory_space<vmem>>) target_semaphore(%63 : memref<!tpu.dma_semaphore, #tpu.memory_space<semaphore_mem>>)
    %c7_i32 = arith.constant 7 : i32
    %64 = arith.addi %0, %c7_i32 : i32
    %65 = arith.index_cast %64 : i32 to index
    %66 = memref.load %arg1[%65] : memref<16xi32, #tpu.memory_space<smem>>
    %c0_i32_41 = arith.constant 0 : i32
    %67 = arith.maxsi %66, %c0_i32_41 : i32
    %c63_i32_42 = arith.constant 63 : i32
    %68 = arith.minsi %67, %c63_i32_42 : i32
    %c7_i32_43 = arith.constant 7 : i32
    %c0_i32_44 = arith.constant 0 : i32
    %69 = tpu.memref_slice %arg3[%68, %c0_i32_44] : memref<64x128xf32, #tpu.memory_space<any>> -> memref<1x128xf32, #tpu.memory_space<any>>
    %c7_i32_45 = arith.constant 7 : i32
    %c0_i32_46 = arith.constant 0 : i32
    %70 = tpu.memref_slice %arg5[%c7_i32_45, %c0_i32_46] : memref<8x128xf32, #tpu.memory_space<vmem>> -> memref<1x128xf32, #tpu.memory_space<vmem>>
    %71 = tpu.memref_slice %arg6[%c7_i32_43] : memref<8x!tpu.dma_semaphore, #tpu.memory_space<semaphore_mem>> -> memref<1x!tpu.dma_semaphore, #tpu.memory_space<semaphore_mem>>
    %72 = tpu.memref_squeeze %71 : memref<1x!tpu.dma_semaphore, #tpu.memory_space<semaphore_mem>> -> memref<!tpu.dma_semaphore, #tpu.memory_space<semaphore_mem>>
    tpu.enqueue_dma source(%69 : memref<1x128xf32, #tpu.memory_space<any>>) target(%70 : memref<1x128xf32, #tpu.memory_space<vmem>>) target_semaphore(%72 : memref<!tpu.dma_semaphore, #tpu.memory_space<semaphore_mem>>)
    %c0_i32_47 = arith.constant 0 : i32
    %c0_i32_48 = arith.constant 0 : i32
    %c0_i32_49 = arith.constant 0 : i32
    %73 = tpu.memref_slice %arg3[%c0_i32_48, %c0_i32_49] : memref<64x128xf32, #tpu.memory_space<any>> -> memref<1x128xf32, #tpu.memory_space<any>>
    %c0_i32_50 = arith.constant 0 : i32
    %c0_i32_51 = arith.constant 0 : i32
    %74 = tpu.memref_slice %arg5[%c0_i32_50, %c0_i32_51] : memref<8x128xf32, #tpu.memory_space<vmem>> -> memref<1x128xf32, #tpu.memory_space<vmem>>
    %75 = tpu.memref_slice %arg6[%c0_i32_47] : memref<8x!tpu.dma_semaphore, #tpu.memory_space<semaphore_mem>> -> memref<1x!tpu.dma_semaphore, #tpu.memory_space<semaphore_mem>>
    %76 = tpu.memref_squeeze %75 : memref<1x!tpu.dma_semaphore, #tpu.memory_space<semaphore_mem>> -> memref<!tpu.dma_semaphore, #tpu.memory_space<semaphore_mem>>
    tpu.wait_dma2 semaphore(%76 : memref<!tpu.dma_semaphore, #tpu.memory_space<semaphore_mem>>) src(%73 : memref<1x128xf32, #tpu.memory_space<any>>) dst(%74 : memref<1x128xf32, #tpu.memory_space<vmem>>)
    %c1_i32_52 = arith.constant 1 : i32
    %c0_i32_53 = arith.constant 0 : i32
    %c0_i32_54 = arith.constant 0 : i32
    %77 = tpu.memref_slice %arg3[%c0_i32_53, %c0_i32_54] : memref<64x128xf32, #tpu.memory_space<any>> -> memref<1x128xf32, #tpu.memory_space<any>>
    %c1_i32_55 = arith.constant 1 : i32
    %c0_i32_56 = arith.constant 0 : i32
    %78 = tpu.memref_slice %arg5[%c1_i32_55, %c0_i32_56] : memref<8x128xf32, #tpu.memory_space<vmem>> -> memref<1x128xf32, #tpu.memory_space<vmem>>
    %79 = tpu.memref_slice %arg6[%c1_i32_52] : memref<8x!tpu.dma_semaphore, #tpu.memory_space<semaphore_mem>> -> memref<1x!tpu.dma_semaphore, #tpu.memory_space<semaphore_mem>>
    %80 = tpu.memref_squeeze %79 : memref<1x!tpu.dma_semaphore, #tpu.memory_space<semaphore_mem>> -> memref<!tpu.dma_semaphore, #tpu.memory_space<semaphore_mem>>
    tpu.wait_dma2 semaphore(%80 : memref<!tpu.dma_semaphore, #tpu.memory_space<semaphore_mem>>) src(%77 : memref<1x128xf32, #tpu.memory_space<any>>) dst(%78 : memref<1x128xf32, #tpu.memory_space<vmem>>)
    %c2_i32_57 = arith.constant 2 : i32
    %c0_i32_58 = arith.constant 0 : i32
    %c0_i32_59 = arith.constant 0 : i32
    %81 = tpu.memref_slice %arg3[%c0_i32_58, %c0_i32_59] : memref<64x128xf32, #tpu.memory_space<any>> -> memref<1x128xf32, #tpu.memory_space<any>>
    %c2_i32_60 = arith.constant 2 : i32
    %c0_i32_61 = arith.constant 0 : i32
    %82 = tpu.memref_slice %arg5[%c2_i32_60, %c0_i32_61] : memref<8x128xf32, #tpu.memory_space<vmem>> -> memref<1x128xf32, #tpu.memory_space<vmem>>
    %83 = tpu.memref_slice %arg6[%c2_i32_57] : memref<8x!tpu.dma_semaphore, #tpu.memory_space<semaphore_mem>> -> memref<1x!tpu.dma_semaphore, #tpu.memory_space<semaphore_mem>>
    %84 = tpu.memref_squeeze %83 : memref<1x!tpu.dma_semaphore, #tpu.memory_space<semaphore_mem>> -> memref<!tpu.dma_semaphore, #tpu.memory_space<semaphore_mem>>
    tpu.wait_dma2 semaphore(%84 : memref<!tpu.dma_semaphore, #tpu.memory_space<semaphore_mem>>) src(%81 : memref<1x128xf32, #tpu.memory_space<any>>) dst(%82 : memref<1x128xf32, #tpu.memory_space<vmem>>)
    %c3_i32_62 = arith.constant 3 : i32
    %c0_i32_63 = arith.constant 0 : i32
    %c0_i32_64 = arith.constant 0 : i32
    %85 = tpu.memref_slice %arg3[%c0_i32_63, %c0_i32_64] : memref<64x128xf32, #tpu.memory_space<any>> -> memref<1x128xf32, #tpu.memory_space<any>>
    %c3_i32_65 = arith.constant 3 : i32
    %c0_i32_66 = arith.constant 0 : i32
    %86 = tpu.memref_slice %arg5[%c3_i32_65, %c0_i32_66] : memref<8x128xf32, #tpu.memory_space<vmem>> -> memref<1x128xf32, #tpu.memory_space<vmem>>
    %87 = tpu.memref_slice %arg6[%c3_i32_62] : memref<8x!tpu.dma_semaphore, #tpu.memory_space<semaphore_mem>> -> memref<1x!tpu.dma_semaphore, #tpu.memory_space<semaphore_mem>>
    %88 = tpu.memref_squeeze %87 : memref<1x!tpu.dma_semaphore, #tpu.memory_space<semaphore_mem>> -> memref<!tpu.dma_semaphore, #tpu.memory_space<semaphore_mem>>
    tpu.wait_dma2 semaphore(%88 : memref<!tpu.dma_semaphore, #tpu.memory_space<semaphore_mem>>) src(%85 : memref<1x128xf32, #tpu.memory_space<any>>) dst(%86 : memref<1x128xf32, #tpu.memory_space<vmem>>)
    %c4_i32_67 = arith.constant 4 : i32
    %c0_i32_68 = arith.constant 0 : i32
    %c0_i32_69 = arith.constant 0 : i32
    %89 = tpu.memref_slice %arg3[%c0_i32_68, %c0_i32_69] : memref<64x128xf32, #tpu.memory_space<any>> -> memref<1x128xf32, #tpu.memory_space<any>>
    %c4_i32_70 = arith.constant 4 : i32
    %c0_i32_71 = arith.constant 0 : i32
    %90 = tpu.memref_slice %arg5[%c4_i32_70, %c0_i32_71] : memref<8x128xf32, #tpu.memory_space<vmem>> -> memref<1x128xf32, #tpu.memory_space<vmem>>
    %91 = tpu.memref_slice %arg6[%c4_i32_67] : memref<8x!tpu.dma_semaphore, #tpu.memory_space<semaphore_mem>> -> memref<1x!tpu.dma_semaphore, #tpu.memory_space<semaphore_mem>>
    %92 = tpu.memref_squeeze %91 : memref<1x!tpu.dma_semaphore, #tpu.memory_space<semaphore_mem>> -> memref<!tpu.dma_semaphore, #tpu.memory_space<semaphore_mem>>
    tpu.wait_dma2 semaphore(%92 : memref<!tpu.dma_semaphore, #tpu.memory_space<semaphore_mem>>) src(%89 : memref<1x128xf32, #tpu.memory_space<any>>) dst(%90 : memref<1x128xf32, #tpu.memory_space<vmem>>)
    %c5_i32_72 = arith.constant 5 : i32
    %c0_i32_73 = arith.constant 0 : i32
    %c0_i32_74 = arith.constant 0 : i32
    %93 = tpu.memref_slice %arg3[%c0_i32_73, %c0_i32_74] : memref<64x128xf32, #tpu.memory_space<any>> -> memref<1x128xf32, #tpu.memory_space<any>>
    %c5_i32_75 = arith.constant 5 : i32
    %c0_i32_76 = arith.constant 0 : i32
    %94 = tpu.memref_slice %arg5[%c5_i32_75, %c0_i32_76] : memref<8x128xf32, #tpu.memory_space<vmem>> -> memref<1x128xf32, #tpu.memory_space<vmem>>
    %95 = tpu.memref_slice %arg6[%c5_i32_72] : memref<8x!tpu.dma_semaphore, #tpu.memory_space<semaphore_mem>> -> memref<1x!tpu.dma_semaphore, #tpu.memory_space<semaphore_mem>>
    %96 = tpu.memref_squeeze %95 : memref<1x!tpu.dma_semaphore, #tpu.memory_space<semaphore_mem>> -> memref<!tpu.dma_semaphore, #tpu.memory_space<semaphore_mem>>
    tpu.wait_dma2 semaphore(%96 : memref<!tpu.dma_semaphore, #tpu.memory_space<semaphore_mem>>) src(%93 : memref<1x128xf32, #tpu.memory_space<any>>) dst(%94 : memref<1x128xf32, #tpu.memory_space<vmem>>)
    %c6_i32_77 = arith.constant 6 : i32
    %c0_i32_78 = arith.constant 0 : i32
    %c0_i32_79 = arith.constant 0 : i32
    %97 = tpu.memref_slice %arg3[%c0_i32_78, %c0_i32_79] : memref<64x128xf32, #tpu.memory_space<any>> -> memref<1x128xf32, #tpu.memory_space<any>>
    %c6_i32_80 = arith.constant 6 : i32
    %c0_i32_81 = arith.constant 0 : i32
    %98 = tpu.memref_slice %arg5[%c6_i32_80, %c0_i32_81] : memref<8x128xf32, #tpu.memory_space<vmem>> -> memref<1x128xf32, #tpu.memory_space<vmem>>
    %99 = tpu.memref_slice %arg6[%c6_i32_77] : memref<8x!tpu.dma_semaphore, #tpu.memory_space<semaphore_mem>> -> memref<1x!tpu.dma_semaphore, #tpu.memory_space<semaphore_mem>>
    %100 = tpu.memref_squeeze %99 : memref<1x!tpu.dma_semaphore, #tpu.memory_space<semaphore_mem>> -> memref<!tpu.dma_semaphore, #tpu.memory_space<semaphore_mem>>
    tpu.wait_dma2 semaphore(%100 : memref<!tpu.dma_semaphore, #tpu.memory_space<semaphore_mem>>) src(%97 : memref<1x128xf32, #tpu.memory_space<any>>) dst(%98 : memref<1x128xf32, #tpu.memory_space<vmem>>)
    %c7_i32_82 = arith.constant 7 : i32
    %c0_i32_83 = arith.constant 0 : i32
    %c0_i32_84 = arith.constant 0 : i32
    %101 = tpu.memref_slice %arg3[%c0_i32_83, %c0_i32_84] : memref<64x128xf32, #tpu.memory_space<any>> -> memref<1x128xf32, #tpu.memory_space<any>>
    %c7_i32_85 = arith.constant 7 : i32
    %c0_i32_86 = arith.constant 0 : i32
    %102 = tpu.memref_slice %arg5[%c7_i32_85, %c0_i32_86] : memref<8x128xf32, #tpu.memory_space<vmem>> -> memref<1x128xf32, #tpu.memory_space<vmem>>
    %103 = tpu.memref_slice %arg6[%c7_i32_82] : memref<8x!tpu.dma_semaphore, #tpu.memory_space<semaphore_mem>> -> memref<1x!tpu.dma_semaphore, #tpu.memory_space<semaphore_mem>>
    %104 = tpu.memref_squeeze %103 : memref<1x!tpu.dma_semaphore, #tpu.memory_space<semaphore_mem>> -> memref<!tpu.dma_semaphore, #tpu.memory_space<semaphore_mem>>
    tpu.wait_dma2 semaphore(%104 : memref<!tpu.dma_semaphore, #tpu.memory_space<semaphore_mem>>) src(%101 : memref<1x128xf32, #tpu.memory_space<any>>) dst(%102 : memref<1x128xf32, #tpu.memory_space<vmem>>)
    %c0 = arith.constant 0 : index
    %c0_87 = arith.constant 0 : index
    %105 = vector.load %arg5[%c0, %c0_87] : memref<8x128xf32, #tpu.memory_space<vmem>>, vector<8x128xf32>
    %cst = arith.constant 11.3137083 : f32
    %106 = vector.broadcast %cst : f32 to vector<8x128xf32>
    %107 = arith.mulf %105, %106 : vector<8x128xf32>
    %c0_88 = arith.constant 0 : index
    %c0_89 = arith.constant 0 : index
    %108 = vector.load %arg2[%c0_88, %c0_89] : memref<8x128xf32, #tpu.memory_space<vmem>>, vector<8x128xf32>
    %109 = arith.addf %107, %108 : vector<8x128xf32>
    %c0_90 = arith.constant 0 : index
    %c0_91 = arith.constant 0 : index
    %110 = vector.load %arg4[%c0_90, %c0_91] : memref<8x128xf32, #tpu.memory_space<vmem>>, vector<8x128xf32>
    tpu.vector_store %arg4[%c0_90, %c0_91], %109 {strides = array<i32>} : memref<8x128xf32, #tpu.memory_space<vmem>>, vector<8x128xf32>,
    return
  }
  func.func @transform_0(%arg0: i32, %arg1: memref<16xi32, #tpu.memory_space<smem>>) -> (i32, i32) {
    %c0_i32 = arith.constant 0 : i32
    %c0_i32_0 = arith.constant 0 : i32
    %c0_i32_1 = arith.constant 0 : i32
    return %c0_i32, %c0_i32_0 : i32, i32
  }
  func.func @transform_2(%arg0: i32, %arg1: memref<16xi32, #tpu.memory_space<smem>>) -> (i32, i32) {
    %c0_i32 = arith.constant 0 : i32
    %c0_i32_0 = arith.constant 0 : i32
    return %arg0, %c0_i32 : i32, i32
  }
}

</mosaic_0001>

<llo_original>
// kernel: tpu_custom_call.1
$region0: #{tpu_custom_call.1}
  #allocation0 [shape = 'u32[]', space=smem, size = 0x4, offset = 0x4, fixed_abs, tag = 'smem constant byte address 0x4 - core index']
  #allocation1 [shape = 'u32[72,128]{1,0:T(1,128)}', space=vmem, size = 0x9000, scoped, tag = 'internal scratch']
  #allocation2 [shape = 'f32[8,128]{1,0:T(8,128)}', space=vmem, size = 0x1000, scoped, tag = 'scratch operand']
  #allocation3 [shape = 's32[8]{0}', space=sflag, size = 0x20, scoped, tag = 'scratch operand']
  #allocation4 [shape = 's32[1]{0}', space=sflag, size = 0x4, scoped, tag = 'scoped memory for tpu_custom_call.1']
  #allocation5 [shape = 'u8[512]{0}', space=smem, size = 0x200, scoped, tag = 'prefetched SMEM operand 0']
  #allocation10 [shape = 's32[]', space=sflag, size = 0x4, offset = 0, fixed_abs, tag = 'sflag constant byte address 0x0 - dummy sync flag']
  #allocation11 [shape = 's32[]', space=sflag, size = 0x4, offset = 0, fixed_abs, tag = 'sflag constant byte address 0x0 - dummy sync flag']
  #allocation12 [shape = 'u32[]', space=smem, size = 0x4, offset = 0x44, fixed_abs, tag = 'smem constant byte address 0x44 - assertion arg 0']
  #allocation13 [shape = 'u32[]', space=smem, size = 0x4, offset = 0x48, fixed_abs, tag = 'smem constant byte address 0x48 - assertion arg 1']
  #allocation14 [shape = 's32[]', space=sflag, size = 0x4, offset = 0, fixed_abs, tag = 'sflag constant byte address 0x0 - dummy sync flag']
  #allocation15 [shape = 's32[]', space=sflag, size = 0x4, offset = 0, fixed_abs, tag = 'sflag constant byte address 0x0 - dummy sync flag']
  #allocation16 [shape = 's32[]', space=sflag, size = 0x4, offset = 0, fixed_abs, tag = 'sflag constant byte address 0x0 - dummy sync flag']
  #allocation17 [shape = 's32[]', space=sflag, size = 0x4, offset = 0, fixed_abs, tag = 'sflag constant byte address 0x0 - dummy sync flag']
  #allocation18 [shape = 's32[]', space=sflag, size = 0x4, offset = 0, fixed_abs, tag = 'sflag constant byte address 0x0 - dummy sync flag']
  #allocation19 [shape = 's32[]', space=sflag, size = 0x4, offset = 0, fixed_abs, tag = 'sflag constant byte address 0x0 - dummy sync flag']
  #allocation20 [shape = 's32[]', space=sflag, size = 0x4, offset = 0, fixed_abs, tag = 'sflag constant byte address 0x0 - dummy sync flag']
  #allocation21 [shape = 's32[]', space=sflag, size = 0x4, offset = 0, fixed_abs, tag = 'sflag constant byte address 0x0 - dummy sync flag']
  #allocation22 [shape = 's32[]', space=sflag, size = 0x4, offset = 0, fixed_abs, tag = 'sflag constant byte address 0x0 - dummy sync flag']
  #allocation23 [shape = 's32[]', space=sflag, size = 0x4, offset = 0, fixed_abs, tag = 'sflag constant byte address 0x0 - dummy sync flag']
  #allocation24 [shape = 's32[]', space=sflag, size = 0x4, offset = 0, fixed_abs, tag = 'sflag constant byte address 0x0 - dummy sync flag']
  #allocation25 [shape = 's32[]', space=sflag, size = 0x4, offset = 0, fixed_abs, tag = 'sflag constant byte address 0x0 - dummy sync flag']
  #allocation26 [shape = 's32[]', space=sflag, size = 0x4, offset = 0, fixed_abs, tag = 'sflag constant byte address 0x0 - dummy sync flag']
  #allocation27 [shape = 's32[]', space=sflag, size = 0x4, offset = 0, fixed_abs, tag = 'sflag constant byte address 0x0 - dummy sync flag']
  %s0 = inlined_call_operand.hbm [shape: s32[16], index: 0, kind: input, shape index: {}]
  %s1 = inlined_call_operand.hbm [shape: f32[8,128], index: 1, kind: input, shape index: {}]
  %s2 = inlined_call_operand.hbm [shape: f32[64,128], index: 2, kind: input, shape index: {}]
  %s3 = inlined_call_operand.hbm [shape: f32[16,128], index: 3, kind: output, shape index: {}]
  %s4 = sld [smem:[#allocation0]]
  $region73: #{tpu_custom_call.1} parent=0
    _
  %s6 = ssub.s32 1, %s4
  %s7 = scalar_select 0, %s6, %s4
  %s9 = sshll.u32 %s0, 4
  %s10 = int_to_ptr.hbm [resolvable:$true] %s9
  %12 = dma.hbm_to_smem %s10, 16, [#allocation5], [#allocation4]
  %14 = dma.done [#allocation4], 16
  %15 = sfence
  $region1: #{tpu_custom_call.1} parent=0
    #allocation6 [shape = 'u8[4096]{0}', space=vmem, size = 0x1000, scoped, tag = 'input window, operand 1, single buffered']
    #allocation7 [shape = 's32[2]{0}', space=sflag, size = 0x8, scoped, tag = 'scoped memory for tpu_custom_call.1']
    #allocation8 [shape = 's32[2]{0}', space=sflag, size = 0x8, scoped, tag = 'scoped memory for tpu_custom_call.1']
    #allocation9 [shape = 'u8[8192]{0}', space=vmem, size = 0x2000, scoped, tag = 'output window, operand 0']
    %16 = vsyncpa [#allocation7], 0
    %17 = vsyncpa [#allocation8], 0
    %s18 = scalar_lea.sflag [#allocation8], 1
    %19 = vsyncpa %s18, 0
    loop: start=0, step=1, limit=4
    $region2: #{tpu_custom_call.1} parent=1 // loop_pre_header
      _
    $region3: #{tpu_custom_call.1} parent=1 // loop_header
      %s21 = sphi 0, %s25
      %p22 = scmp.ge.s32.totalorder %s21, 4
      %s29 = sphi 0, %s29
      %s31 = sphi 0, %s29
      %s32 = sphi 0, %s31
      %s46 = sphi 0, %s32
      %s52 = sphi 0, %s54
      %s55 = sphi 0, %s52
      %s56 = sphi 0, %s55
      %s72 = sphi 0, %s56
    $region4: #{tpu_custom_call.1} parent=1 // loop_header_branch
      %24 = sbr.rel (%p22) target = $region8
    $region5: #{tpu_custom_call.1} parent=1 // loop_body
      %s26 = ssub.s32 %s21, 1
      %s27 = ssub.s32 %s21, 2
      %s28 = sadd.s32 %s21, 1
      %s30 = sadd.s32 %s29, 1
      %p33 = scmp.eq.s32.totalorder %s21, 1
      %p34 = scmp.ne.s32.totalorder %s29, %s31
      %p35 = scmp.eq.s32.totalorder %s21, 0
      %p36 = por %p34, %p35
      %p37 = scmp.ne.s32.totalorder %s29, %s31
      %p38 = scmp.eq.s32.totalorder %s26, 1
      %p39 = por %p37, %p38
      %p40 = scmp.ne.s32.totalorder %s31, %s32
      %p41 = scmp.eq.s32.totalorder %s26, 0
      %p42 = por %p40, %p41
      %p43 = scmp.ne.s32.totalorder %s31, %s32
      %p44 = scmp.eq.s32.totalorder %s27, 1
      %p45 = por %p43, %p44
      %p47 = scmp.ne.s32.totalorder %s32, %s46
      %p48 = scmp.eq.s32.totalorder %s27, 0
      %p49 = por %p47, %p48
      %s50 = ssub.s32 %s21, %s28
      %p51 = scmp.eq.s32.totalorder %s50, 0
      %s53 = sadd.s32 %s52, 1
      %s54 = scalar_select %p51, %s52, %s53
      %p57 = pneg %p51
      %p58 = scmp.eq.s32.totalorder %s21, 1
      %p59 = por %p57, %p58
      %p60 = scmp.ne.s32.totalorder %s52, %s55
      %p61 = scmp.eq.s32.totalorder %s21, 0
      %p62 = por %p60, %p61
      %p63 = scmp.ne.s32.totalorder %s52, %s55
      %p64 = scmp.eq.s32.totalorder %s26, 1
      %p65 = por %p63, %p64
      %p66 = scmp.ne.s32.totalorder %s55, %s56
      %p67 = scmp.eq.s32.totalorder %s26, 0
      %p68 = por %p66, %p67
      %p69 = scmp.ne.s32.totalorder %s55, %s56
      %p70 = scmp.eq.s32.totalorder %s27, 1
      %p71 = por %p69, %p70
      %p73 = scmp.ne.s32.totalorder %s56, %s72
      %p74 = scmp.eq.s32.totalorder %s27, 0
      %p75 = por %p73, %p74
      %p76 = scmp.le.s32.totalorder 1, %s21
      %p77 = scmp.lt.s32.totalorder %s21, 3
      %p78 = pnand %p76, %p77
      %p79 = pneg %p78
      // Predicated region
      $region9: #{tpu_custom_call.1} parent=5 // pred_check
        _
      $region10: #{tpu_custom_call.1} parent=5 // pred_check_branch
        %81 = sbr.rel (%p78) target = $region12
      $region11: #{tpu_custom_call.1} parent=5 // pred_region
        %s82 = ssub.s32 %s21, 1
        // Predicated region
        $region13: #{tpu_custom_call.1} parent=11 // pred_check
          %p83 = pneg %p42
        $region14: #{tpu_custom_call.1} parent=11 // pred_check_branch
          %85 = sbr.rel (%p83) target = $region16
        $region15: #{tpu_custom_call.1} parent=11 // pred_region
          %87 = vsyncadd [#allocation7], 0
          %s89 = sshll.u32 %s1, 4
          %s90 = int_to_ptr.hbm [resolvable:$true] %s89
          %s91 = sshll.u32 [#allocation6], 4
          %s92 = int_to_ptr.vmem [resolvable:$true] %s91
          %94 = dma.hbm_to_vmem [thread:$0]  %s90, 128, %s92, [#allocation7]
        $region16: #{tpu_custom_call.1} parent=11 // pred_fallthru
          _
      $region12: #{tpu_custom_call.1} parent=5 // pred_fallthru
        _
      %p95 = scmp.lt.s32.totalorder %s21, 2
      // Predicated region
      $region17: #{tpu_custom_call.1} parent=5 // pred_check
        %p96 = pneg %p95
      $region18: #{tpu_custom_call.1} parent=5 // pred_check_branch
        %98 = sbr.rel (%p96) target = $region20
      $region19: #{tpu_custom_call.1} parent=5 // pred_region
        _
      $region20: #{tpu_custom_call.1} parent=5 // pred_fallthru
        _
      %p99 = scmp.le.s32.totalorder 1, %s21
      %p100 = scmp.lt.s32.totalorder %s21, 3
      %p101 = pnand %p99, %p100
      %p102 = pneg %p101
      // Predicated region
      $region21: #{tpu_custom_call.1} parent=5 // pred_check
        _
      $region22: #{tpu_custom_call.1} parent=5 // pred_check_branch
        %104 = sbr.rel (%p101) target = $region24
      $region23: #{tpu_custom_call.1} parent=5 // pred_region
        %s105 = ssub.s32 %s21, 1
        // Predicated region
        $region25: #{tpu_custom_call.1} parent=23 // pred_check
          %p106 = pneg %p42
        $region26: #{tpu_custom_call.1} parent=23 // pred_check_branch
          %108 = sbr.rel (%p106) target = $region28
        $region27: #{tpu_custom_call.1} parent=23 // pred_region
          %110 = dma.done [#allocation7], 128
        $region28: #{tpu_custom_call.1} parent=23 // pred_fallthru
          _
        %p111 = pneg %p42
        %p112 = pneg %p39
        %p113 = pneg %p68
        %p114 = pneg %p65
        %s115 = sand.u32 %s55, 1
        %s116 = scalar_lea.sflag [#allocation8], %s115
        %s117 = sand.u32 %s55, 1
        %s118 = smul.addr %s117, 8
        %s119 = scalar_lea.vmem [#allocation9], %s118
        %s120 = smul.u32 %s26, 8
        %s121 = sld [smem:[#allocation5 + %s120]]
        %p122 = scmp.gt.s32.totalorder %s121, 0
        %s123 = scalar_select %p122, %s121, 0
        %p124 = scmp.lt.s32.totalorder %s123, 63
        %s125 = scalar_select %p124, %s123, 63
        %s126 = scalar_lea.hbm %s2, %s125
        // Predicated region
        $region29: #{tpu_custom_call.1} parent=23 // pred_check
          _
        $region30: #{tpu_custom_call.1} parent=23 // pred_check_branch
          %128 = sbr.rel target = $region32
        $region31: #{tpu_custom_call.1} parent=23 // pred_region
          %129 = sst [smem:[#allocation12]] [#allocation11]
          %130 = sst [smem:[#allocation13]] [#allocation10]
        $region32: #{tpu_custom_call.1} parent=23 // pred_fallthru
          _
        %132 = shalt.err (0)
        %s134 = sshll.u32 %s126, 4
        %s135 = int_to_ptr.hbm [resolvable:$true] %s134
        %s136 = sshll.u32 [#allocation2], 4
        %s137 = int_to_ptr.vmem [resolvable:$true] %s136
        %139 = dma.hbm_to_vmem [thread:$0]  %s135, 16, %s137, [#allocation3]
        %s140 = sadd.s32 %s120, 1
        %s141 = sld [smem:[#allocation5 + %s140]]
        %p142 = scmp.gt.s32.totalorder %s141, 0
        %s143 = scalar_select %p142, %s141, 0
        %p144 = scmp.lt.s32.totalorder %s143, 63
        %s145 = scalar_select %p144, %s143, 63
        %s146 = scalar_lea.hbm %s2, %s145
        %s147 = scalar_lea.vmem [#allocation2], 1
        %s148 = scalar_lea.sflag [#allocation3], 1
        // Predicated region
        $region33: #{tpu_custom_call.1} parent=23 // pred_check
          _
        $region34: #{tpu_custom_call.1} parent=23 // pred_check_branch
          %150 = sbr.rel target = $region36
        $region35: #{tpu_custom_call.1} parent=23 // pred_region
          %151 = sst [smem:[#allocation12]] [#allocation15]
          %152 = sst [smem:[#allocation13]] [#allocation14]
        $region36: #{tpu_custom_call.1} parent=23 // pred_fallthru
          _
        %154 = shalt.err (0)
        %s156 = sshll.u32 %s146, 4
        %s157 = int_to_ptr.hbm [resolvable:$true] %s156
        %s158 = sshll.u32 %s147, 4
        %s159 = int_to_ptr.vmem [resolvable:$true] %s158
        %161 = dma.hbm_to_vmem [thread:$0]  %s157, 16, %s159, %s148
        %s162 = sadd.s32 %s120, 2
        %s163 = sld [smem:[#allocation5 + %s162]]
        %p164 = scmp.gt.s32.totalorder %s163, 0
        %s165 = scalar_select %p164, %s163, 0
        %p166 = scmp.lt.s32.totalorder %s165, 63
        %s167 = scalar_select %p166, %s165, 63
        %s168 = scalar_lea.hbm %s2, %s167
        %s169 = scalar_lea.vmem [#allocation2], 2
        %s170 = scalar_lea.sflag [#allocation3], 2
        // Predicated region
        $region37: #{tpu_custom_call.1} parent=23 // pred_check
          _
        $region38: #{tpu_custom_call.1} parent=23 // pred_check_branch
          %172 = sbr.rel target = $region40
        $region39: #{tpu_custom_call.1} parent=23 // pred_region
          %173 = sst [smem:[#allocation12]] [#allocation17]
          %174 = sst [smem:[#allocation13]] [#allocation16]
        $region40: #{tpu_custom_call.1} parent=23 // pred_fallthru
          _
        %176 = shalt.err (0)
        %s178 = sshll.u32 %s168, 4
        %s179 = int_to_ptr.hbm [resolvable:$true] %s178
        %s180 = sshll.u32 %s169, 4
        %s181 = int_to_ptr.vmem [resolvable:$true] %s180
        %183 = dma.hbm_to_vmem [thread:$0]  %s179, 16, %s181, %s170
        %s184 = sadd.s32 %s120, 3
        %s185 = sld [smem:[#allocation5 + %s184]]
        %p186 = scmp.gt.s32.totalorder %s185, 0
        %s187 = scalar_select %p186, %s185, 0
        %p188 = scmp.lt.s32.totalorder %s187, 63
        %s189 = scalar_select %p188, %s187, 63
        %s190 = scalar_lea.hbm %s2, %s189
        %s191 = scalar_lea.vmem [#allocation2], 3
        %s192 = scalar_lea.sflag [#allocation3], 3
        // Predicated region
        $region41: #{tpu_custom_call.1} parent=23 // pred_check
          _
        $region42: #{tpu_custom_call.1} parent=23 // pred_check_branch
          %194 = sbr.rel target = $region44
        $region43: #{tpu_custom_call.1} parent=23 // pred_region
          %195 = sst [smem:[#allocation12]] [#allocation19]
          %196 = sst [smem:[#allocation13]] [#allocation18]
        $region44: #{tpu_custom_call.1} parent=23 // pred_fallthru
          _
        %198 = shalt.err (0)
        %s200 = sshll.u32 %s190, 4
        %s201 = int_to_ptr.hbm [resolvable:$true] %s200
        %s202 = sshll.u32 %s191, 4
        %s203 = int_to_ptr.vmem [resolvable:$true] %s202
        %205 = dma.hbm_to_vmem [thread:$0]  %s201, 16, %s203, %s192
        %s206 = sadd.s32 %s120, 4
        %s207 = sld [smem:[#allocation5 + %s206]]
        %p208 = scmp.gt.s32.totalorder %s207, 0
        %s209 = scalar_select %p208, %s207, 0
        %p210 = scmp.lt.s32.totalorder %s209, 63
        %s211 = scalar_select %p210, %s209, 63
        %s212 = scalar_lea.hbm %s2, %s211
        %s213 = scalar_lea.vmem [#allocation2], 4
        %s214 = scalar_lea.sflag [#allocation3], 4
        // Predicated region
        $region45: #{tpu_custom_call.1} parent=23 // pred_check
          _
        $region46: #{tpu_custom_call.1} parent=23 // pred_check_branch
          %216 = sbr.rel target = $region48
        $region47: #{tpu_custom_call.1} parent=23 // pred_region
          %217 = sst [smem:[#allocation12]] [#allocation21]
          %218 = sst [smem:[#allocation13]] [#allocation20]
        $region48: #{tpu_custom_call.1} parent=23 // pred_fallthru
          _
        %220 = shalt.err (0)
        %s222 = sshll.u32 %s212, 4
        %s223 = int_to_ptr.hbm [resolvable:$true] %s222
        %s224 = sshll.u32 %s213, 4
        %s225 = int_to_ptr.vmem [resolvable:$true] %s224
        %227 = dma.hbm_to_vmem [thread:$0]  %s223, 16, %s225, %s214
        %s228 = sadd.s32 %s120, 5
        %s229 = sld [smem:[#allocation5 + %s228]]
        %p230 = scmp.gt.s32.totalorder %s229, 0
        %s231 = scalar_select %p230, %s229, 0
        %p232 = scmp.lt.s32.totalorder %s231, 63
        %s233 = scalar_select %p232, %s231, 63
        %s234 = scalar_lea.hbm %s2, %s233
        %s235 = scalar_lea.vmem [#allocation2], 5
        %s236 = scalar_lea.sflag [#allocation3], 5
        // Predicated region
        $region49: #{tpu_custom_call.1} parent=23 // pred_check
          _
        $region50: #{tpu_custom_call.1} parent=23 // pred_check_branch
          %238 = sbr.rel target = $region52
        $region51: #{tpu_custom_call.1} parent=23 // pred_region
          %239 = sst [smem:[#allocation12]] [#allocation23]
          %240 = sst [smem:[#allocation13]] [#allocation22]
        $region52: #{tpu_custom_call.1} parent=23 // pred_fallthru
          _
        %242 = shalt.err (0)
        %s244 = sshll.u32 %s234, 4
        %s245 = int_to_ptr.hbm [resolvable:$true] %s244
        %s246 = sshll.u32 %s235, 4
        %s247 = int_to_ptr.vmem [resolvable:$true] %s246
        %249 = dma.hbm_to_vmem [thread:$0]  %s245, 16, %s247, %s236
        %s250 = sadd.s32 %s120, 6
        %s251 = sld [smem:[#allocation5 + %s250]]
        %p252 = scmp.gt.s32.totalorder %s251, 0
        %s253 = scalar_select %p252, %s251, 0
        %p254 = scmp.lt.s32.totalorder %s253, 63
        %s255 = scalar_select %p254, %s253, 63
        %s256 = scalar_lea.hbm %s2, %s255
        %s257 = scalar_lea.vmem [#allocation2], 6
        %s258 = scalar_lea.sflag [#allocation3], 6
        // Predicated region
        $region53: #{tpu_custom_call.1} parent=23 // pred_check
          _
        $region54: #{tpu_custom_call.1} parent=23 // pred_check_branch
          %260 = sbr.rel target = $region56
        $region55: #{tpu_custom_call.1} parent=23 // pred_region
          %261 = sst [smem:[#allocation12]] [#allocation25]
          %262 = sst [smem:[#allocation13]] [#allocation24]
        $region56: #{tpu_custom_call.1} parent=23 // pred_fallthru
          _
        %264 = shalt.err (0)
        %s266 = sshll.u32 %s256, 4
        %s267 = int_to_ptr.hbm [resolvable:$true] %s266
        %s268 = sshll.u32 %s257, 4
        %s269 = int_to_ptr.vmem [resolvable:$true] %s268
        %271 = dma.hbm_to_vmem [thread:$0]  %s267, 16, %s269, %s258
        %s272 = sadd.s32 %s120, 7
        %s273 = sld [smem:[#allocation5 + %s272]]
        %p274 = scmp.gt.s32.totalorder %s273, 0
        %s275 = scalar_select %p274, %s273, 0
        %p276 = scmp.lt.s32.totalorder %s275, 63
        %s277 = scalar_select %p276, %s275, 63
        %s278 = scalar_lea.hbm %s2, %s277
        %s279 = scalar_lea.vmem [#allocation2], 7
        %s280 = scalar_lea.sflag [#allocation3], 7
        // Predicated region
        $region57: #{tpu_custom_call.1} parent=23 // pred_check
          _
        $region58: #{tpu_custom_call.1} parent=23 // pred_check_branch
          %282 = sbr.rel target = $region60
        $region59: #{tpu_custom_call.1} parent=23 // pred_region
          %283 = sst [smem:[#allocation12]] [#allocation27]
          %284 = sst [smem:[#allocation13]] [#allocation26]
        $region60: #{tpu_custom_call.1} parent=23 // pred_fallthru
          _
        %286 = shalt.err (0)
        %s288 = sshll.u32 %s278, 4
        %s289 = int_to_ptr.hbm [resolvable:$true] %s288
        %s290 = sshll.u32 %s279, 4
        %s291 = int_to_ptr.vmem [resolvable:$true] %s290
        %293 = dma.hbm_to_vmem [thread:$0]  %s289, 16, %s291, %s280
        %s294 = smul.u32 1, 1
        %s295 = sshll.u32 %s294, 4
        %296 = dma.done [#allocation3], %s295
        %s297 = sshll.u32 %s294, 4
        %298 = dma.done %s148, %s297
        %s299 = sshll.u32 %s294, 4
        %300 = dma.done %s170, %s299
        %s301 = sshll.u32 %s294, 4
        %302 = dma.done %s192, %s301
        %s303 = sshll.u32 %s294, 4
        %304 = dma.done %s214, %s303
        %s305 = sshll.u32 %s294, 4
        %306 = dma.done %s236, %s305
        %s307 = sshll.u32 %s294, 4
        %308 = dma.done %s258, %s307
        %s309 = sshll.u32 %s294, 4
        %310 = dma.done %s280, %s309
        %v311 = vld [vmem:[#allocation2] sm:$0xff]
        %v312 = vmul.f32 %v311, 11.313708
        %v313 = vld [vmem:[#allocation6] sm:$0xff]
        %v314 = vadd.f32 %v312, %v313
        %315 = vst [vmem:[%s119] sm:$0xff] %v314
        %s316 = sand.u32 %s55, 1
        %s317 = scalar_lea.sflag [#allocation8], %s316
        %s318 = sand.u32 %s55, 1
        %s319 = smul.addr %s318, 8
        %s320 = scalar_lea.vmem [#allocation9], %s319
        // Predicated region
        $region61: #{tpu_custom_call.1} parent=23 // pred_check
          %p321 = pneg %p65
        $region62: #{tpu_custom_call.1} parent=23 // pred_check_branch
          %323 = sbr.rel (%p321) target = $region64
        $region63: #{tpu_custom_call.1} parent=23 // pred_region
          %325 = vsyncadd %s317, 0
          %s326 = smul.addr %s26, 8
          %s327 = scalar_lea.hbm %s3, %s326
          %s329 = sshll.u32 %s320, 4
          %s330 = int_to_ptr.vmem [resolvable:$true] %s329
          %s331 = sshll.u32 %s327, 4
          %s332 = int_to_ptr.hbm [resolvable:$true] %s331
          %334 = dma.vmem_to_hbm [thread:$0]  %s330, 128, %s332, %s317
        $region64: #{tpu_custom_call.1} parent=23 // pred_fallthru
          _
      $region24: #{tpu_custom_call.1} parent=5 // pred_fallthru
        _
      %p335 = scmp.le.s32.totalorder 2, %s21
      // Predicated region
      $region65: #{tpu_custom_call.1} parent=5 // pred_check
        %p336 = pneg %p335
      $region66: #{tpu_custom_call.1} parent=5 // pred_check_branch
        %338 = sbr.rel (%p336) target = $region68
      $region67: #{tpu_custom_call.1} parent=5 // pred_region
        %s339 = ssub.s32 %s21, 2
        // Predicated region
        $region69: #{tpu_custom_call.1} parent=67 // pred_check
          %p340 = pneg %p71
        $region70: #{tpu_custom_call.1} parent=67 // pred_check_branch
          %342 = sbr.rel (%p340) target = $region72
        $region71: #{tpu_custom_call.1} parent=67 // pred_region
          %s343 = sand.u32 %s56, 1
          %s344 = scalar_lea.sflag [#allocation8], %s343
          %s345 = sand.u32 %s56, 1
          %s346 = smul.addr %s345, 8
          %s347 = scalar_lea.vmem [#allocation9], %s346
          %349 = dma.done %s344, 128
        $region72: #{tpu_custom_call.1} parent=67 // pred_fallthru
          _
      $region68: #{tpu_custom_call.1} parent=5 // pred_fallthru
        _
    $region6: #{tpu_custom_call.1} parent=1 // loop_footer
      %s25 = sadd.s32 1, %s21
    $region7: #{tpu_custom_call.1} parent=1 // loop_footer_branch
      %20 = sbr.rel target = $region3
    $region8: #{tpu_custom_call.1} parent=1 // loop_exit
      _
    %350 = vsyncpa [#allocation7], 1
    %s351 = scalar_lea.sflag [#allocation7], 1
    %352 = vsyncpa %s351, 1
    %353 = vsyncpa [#allocation8], 1
    %s354 = scalar_lea.sflag [#allocation8], 1
    %355 = vsyncpa %s354, 1
  %356 = vsyncmov [#allocation3]
  %s357 = vpop.sfrf %356
  %p358 = scmp.eq.s32.totalorder %s357, 0
  %p359 = pneg %p358
  %361 = shalt.err (%p359)
  %s362 = scalar_lea.sflag [#allocation3], 1
  %363 = vsyncmov %s362
  %s364 = vpop.sfrf %363
  %p365 = scmp.eq.s32.totalorder %s364, 0
  %p366 = pneg %p365
  %368 = shalt.err (%p366)
  %s369 = scalar_lea.sflag [#allocation3], 2
  %370 = vsyncmov %s369
  %s371 = vpop.sfrf %370
  %p372 = scmp.eq.s32.totalorder %s371, 0
  %p373 = pneg %p372
  %375 = shalt.err (%p373)
  %s376 = scalar_lea.sflag [#allocation3], 3
  %377 = vsyncmov %s376
  %s378 = vpop.sfrf %377
  %p379 = scmp.eq.s32.totalorder %s378, 0
  %p380 = pneg %p379
  %382 = shalt.err (%p380)
  %s383 = scalar_lea.sflag [#allocation3], 4
  %384 = vsyncmov %s383
  %s385 = vpop.sfrf %384
  %p386 = scmp.eq.s32.totalorder %s385, 0
  %p387 = pneg %p386
  %389 = shalt.err (%p387)
  %s390 = scalar_lea.sflag [#allocation3], 5
  %391 = vsyncmov %s390
  %s392 = vpop.sfrf %391
  %p393 = scmp.eq.s32.totalorder %s392, 0
  %p394 = pneg %p393
  %396 = shalt.err (%p394)
  %s397 = scalar_lea.sflag [#allocation3], 6
  %398 = vsyncmov %s397
  %s399 = vpop.sfrf %398
  %p400 = scmp.eq.s32.totalorder %s399, 0
  %p401 = pneg %p400
  %403 = shalt.err (%p401)
  %s404 = scalar_lea.sflag [#allocation3], 7
  %405 = vsyncmov %s404
  %s406 = vpop.sfrf %405
  %p407 = scmp.eq.s32.totalorder %s406, 0
  %p408 = pneg %p407
  %410 = shalt.err (%p408)

</llo_original>
